<compile_context>
chip_gen: v7x
topology: tpu7x:2x2x1
jax: 0.10.0
libtpu: 0.0.40
codegen_flags: <defaults>
</compile_context>

<pallas_src>
import jax
import jax.numpy as jnp
from jax.experimental import pallas as pl
from jax.experimental.pallas import tpu as pltpu

HIDDEN = 256
NEG_SLOPE = 0.01  # F.leaky_relu default negative_slope


def _leaky_relu(x):
    return jnp.where(x > 0, x, NEG_SLOPE * x)


def _cdiv(a, b):
    return (a + b - 1) // b


def _round_up(x, m):
    return ((x + m - 1) // m) * m


def _vmem_capacity_bytes():
    try:
        return int(pltpu.get_tpu_info().vmem_capacity_bytes)
    except Exception:
        return 128 * 1024 * 1024  # conservative v5e/v6e default


# ---------------------------------------------------------------------------
# Kernels
# ---------------------------------------------------------------------------
def _encoder_kernel(x_ref, w1_ref, b1_ref, w2_ref, b2_ref, o_ref):
    # Two MXU matmuls with f32 accumulation; bias adds + leaky_relu in f32.
    h = jnp.dot(x_ref[...], w1_ref[...], preferred_element_type=jnp.float32)
    h = _leaky_relu(h + b1_ref[...])
    y = jnp.dot(h.astype(w2_ref.dtype), w2_ref[...],
                preferred_element_type=jnp.float32) + b2_ref[...]
    o_ref[...] = _leaky_relu(y).astype(o_ref.dtype)


def _encoder_ksplit_kernel(x_ref, w1_ref, b1_ref, w2_ref, b2_ref, o_ref, h_acc):
    # K-tiled first matmul accumulated in f32 VMEM scratch; epilogue (bias,
    # activation, second matmul, store) runs only on the last K step.
    ki = pl.program_id(1)

    @pl.when(ki == 0)
    def _():
        h_acc[...] = jnp.zeros_like(h_acc)

    h_acc[...] += jnp.dot(x_ref[...], w1_ref[...],
                          preferred_element_type=jnp.float32)

    @pl.when(ki == pl.num_programs(1) - 1)
    def _():
        h = _leaky_relu(h_acc[...] + b1_ref[...])
        y = jnp.dot(h.astype(w2_ref.dtype), w2_ref[...],
                    preferred_element_type=jnp.float32) + b2_ref[...]
        o_ref[...] = _leaky_relu(y).astype(o_ref.dtype)


# ---------------------------------------------------------------------------
# Wrapper
# ---------------------------------------------------------------------------
def input_encoder(x, w1, b1, w2, b2, *, tm_max=1024, tk=None,
                  k_split_threshold=2048, params_dtype=None, out_dtype=None):
    """x: (N, input_dim); w1: (input_dim, 256); b1: (256,);
    w2: (256, output_dim); b2: (output_dim,).

    params_dtype: optionally store X/W1/W2 in bf16 (f32 MXU accumulation is
    kept) -- recommended on v6e/v7x when ~1e-2 tolerance is acceptable.
    tk: optional K tile (multiple of 128, must divide input_dim) to force the
    K-split accumulator path; otherwise chosen automatically for large K.
    """
    n, k = x.shape
    kh, hidden = w1.shape
    h2, out_dim = w2.shape
    assert k == kh and hidden == HIDDEN and h2 == HIDDEN

    if params_dtype is not None:
        x = x.astype(params_dtype)
        w1 = w1.astype(params_dtype)
        w2 = w2.astype(params_dtype)
    if out_dtype is None:
        out_dtype = x.dtype

    # Biases as (1, out) rows, kept f32 (added to the f32 accumulators).
    b1r = jnp.reshape(b1, (1, HIDDEN)).astype(jnp.float32)
    b2r = jnp.reshape(b2, (1, out_dim)).astype(jnp.float32)

    x_bytes = jnp.dtype(x.dtype).itemsize
    w_bytes = jnp.dtype(w1.dtype).itemsize
    o_bytes = jnp.dtype(out_dtype).itemsize

    # --- K tile selection (only split for large input_dim) -------------------
    if tk is None:
        tk_eff = k
        if k > k_split_threshold:
            for cand in (1024, 512, 256, 128):
                if k % cand == 0:
                    tk_eff = cand
                    break
    else:
        assert tk % 128 == 0 and k % tk == 0, "tk must be a 128-multiple dividing k"
        tk_eff = tk
    k_steps = _cdiv(k, tk_eff)

    # --- VMEM-aware row tile --------------------------------------------------
    vmem_cap = _vmem_capacity_bytes()
    budget = int(vmem_cap * 0.7)  # headroom for compiler scratch / spills
    weight_bytes = 2 * (k * HIDDEN + HIDDEN * out_dim) * w_bytes + 8 * 1024
    per_row = (2 * tk_eff * x_bytes      # double-buffered X tile
               + 2 * out_dim * o_bytes   # double-buffered output tile
               + HIDDEN * 4              # f32 hidden activations / accumulator
               + out_dim * 4)            # f32 second-layer accumulator
    tm_fit = max(8, (budget - weight_bytes) // max(per_row, 1))
    tm_cap = max(8, min(tm_max, (tm_fit // 8) * 8))

    # Keep >= 4 row steps when there is enough work: restores DMA/compute
    # overlap and keeps both v7x TensorCores busy under the "parallel" axis.
    min_steps = 4
    tm_eff = min(tm_cap, max(8, _round_up(_cdiv(n, min_steps), 8)))
    row_steps = _cdiv(n, tm_eff)  # ragged last row tile handled by Pallas masking

    # Advisory cost estimate for XLA's scheduler.
    cost = pl.CostEstimate(
        flops=2 * n * (k * HIDDEN + HIDDEN * out_dim),
        transcendentals=0,
        bytes_accessed=(n * k * x_bytes
                        + (k * HIDDEN + HIDDEN * out_dim) * w_bytes
                        + (HIDDEN + out_dim) * 4
                        + n * out_dim * o_bytes),
    )

    out_shape = jax.ShapeDtypeStruct((n, out_dim), out_dtype)
    compiler_params = pltpu.CompilerParams(
        dimension_semantics=("parallel",) if k_steps == 1 else ("parallel", "arbitrary"),
        vmem_limit_bytes=budget,
    )

    if k_steps == 1:
        fn = pl.pallas_call(
            _encoder_kernel,
            out_shape=out_shape,
            grid_spec=pltpu.PrefetchScalarGridSpec(
                num_scalar_prefetch=0,
                grid=(row_steps,),
                in_specs=[
                    pl.BlockSpec((tm_eff, k), lambda i: (i, 0)),        # X rows (native K)
                    pl.BlockSpec((k, HIDDEN), lambda i: (0, 0)),        # W1 (grid-invariant)
                    pl.BlockSpec((1, HIDDEN), lambda i: (0, 0)),        # b1
                    pl.BlockSpec((HIDDEN, out_dim), lambda i: (0, 0)),  # W2
                    pl.BlockSpec((1, out_dim), lambda i: (0, 0)),       # b2
                ],
                out_specs=pl.BlockSpec((tm_eff, out_dim), lambda i: (i, 0)),
            ),
            compiler_params=compiler_params,
            cost_estimate=cost,
        )
        return fn(x, w1, b1r, w2, b2r)

    fn = pl.pallas_call(
        _encoder_ksplit_kernel,
        out_shape=out_shape,
        grid_spec=pltpu.PrefetchScalarGridSpec(
            num_scalar_prefetch=0,
            grid=(row_steps, k_steps),
            in_specs=[
                pl.BlockSpec((tm_eff, tk_eff), lambda i, kk: (i, kk)),     # X tile
                pl.BlockSpec((tk_eff, HIDDEN), lambda i, kk: (kk, 0)),     # W1 K-slab
                pl.BlockSpec((1, HIDDEN), lambda i, kk: (0, 0)),           # b1
                pl.BlockSpec((HIDDEN, out_dim), lambda i, kk: (0, 0)),     # W2
                pl.BlockSpec((1, out_dim), lambda i, kk: (0, 0)),          # b2
            ],
            out_specs=pl.BlockSpec((tm_eff, out_dim), lambda i, kk: (i, 0)),
            scratch_shapes=[pltpu.VMEM((tm_eff, HIDDEN), jnp.float32)],
        ),
        compiler_params=compiler_params,
        cost_estimate=cost,
    )
    return fn(x, w1, b1r, w2, b2r)


def reference(x, w1, b1, w2, b2):
    h = x @ w1 + jnp.reshape(b1, (1, -1))
    h = jnp.where(h > 0, h, NEG_SLOPE * h)
    y = h @ w2 + jnp.reshape(b2, (1, -1))
    return jnp.where(y > 0, y, NEG_SLOPE * y)


if __name__ == "__main__":
    key = jax.random.PRNGKey(0)

    def make_params(pkey, input_dim, output_dim):
        k_w1, k_b1, k_w2, k_b2 = jax.random.split(pkey, 4)
        lim1 = 1.0 / (input_dim ** 0.5)
        w1 = jax.random.uniform(k_w1, (input_dim, HIDDEN), jnp.float32, -lim1, lim1)
        b1 = jax.random.uniform(k_b1, (HIDDEN,), jnp.float32, -lim1, lim1)
        lim2 = 1.0 / (HIDDEN ** 0.5)
        w2 = jax.random.uniform(k_w2, (HIDDEN, output_dim), jnp.float32, -lim2, lim2)
        b2 = jax.random.uniform(k_b2, (output_dim,), jnp.float32, -lim2, lim2)
        return w1, b1, w2, b2

    k0, k1, k2, k3 = jax.random.split(key, 4)

    # Case 1: small batch, narrow in/out dims -- no padding anywhere,
    # lane-masked output stores, single grid step.
    batch, input_dim, output_dim = 8, 32, 32
    x = jax.random.normal(k0, (batch, input_dim), dtype=jnp.float32)
    w1, b1, w2, b2 = make_params(k1, input_dim, output_dim)
    out = jax.block_until_ready(input_encoder(x, w1, b1, w2, b2))
    ref = reference(x, w1, b1, w2, b2)
    assert out.shape == (batch, output_dim)
    assert jnp.allclose(out, ref, atol=1e-5, rtol=1e-5)

    # Case 2: exercises the K-split accumulator path, a ragged last row tile,
    # and a non-128 output width. Tolerance is slightly looser because the
    # chunked K accumulation order differs from the single-dot reference.
    batch2, input_dim2, output_dim2 = 100, 512, 48
    x2 = jax.random.normal(k2, (batch2, input_dim2), dtype=jnp.float32)
    w1b, b1b, w2b, b2b = make_params(k3, input_dim2, output_dim2)
    out2 = jax.block_until_ready(input_encoder(x2, w1b, b1b, w2b, b2b, tk=128))
    ref2 = reference(x2, w1b, b1b, w2b, b2b)
    assert out2.shape == (batch2, output_dim2)
    assert jnp.allclose(out2, ref2, atol=1e-3, rtol=1e-3)

    print("KERNEL_OK")
</pallas_src>

<mosaic_0001>
module attributes {stable_mosaic.version = 11 : i64} {
  func.func @_encoder_kernel(%arg0: i32, %arg1: memref<8x32xf32, #tpu.memory_space<vmem>>, %arg2: memref<32x256xf32, #tpu.memory_space<vmem>>, %arg3: memref<1x256xf32, #tpu.memory_space<vmem>>, %arg4: memref<256x32xf32, #tpu.memory_space<vmem>>, %arg5: memref<1x32xf32, #tpu.memory_space<vmem>>, %arg6: memref<8x32xf32, #tpu.memory_space<vmem>>) attributes {dimension_semantics = [#tpu.dimension_semantics<parallel>], iteration_bounds = array<i64: 1>, scalar_prefetch = 0 : i64, scratch_operands = 0 : i64, tpu.core_type = #tpu.core_type<tc>, window_params = [{transform_indices = @transform_0, window_bounds = array<i64: 8, 32>}, {pipeline_mode = #tpu.pipeline_mode<synchronous>, transform_indices = @transform_1, window_bounds = array<i64: 32, 256>}, {pipeline_mode = #tpu.pipeline_mode<synchronous>, transform_indices = @transform_2, window_bounds = array<i64: 1, 256>}, {pipeline_mode = #tpu.pipeline_mode<synchronous>, transform_indices = @transform_3, window_bounds = array<i64: 256, 32>}, {pipeline_mode = #tpu.pipeline_mode<synchronous>, transform_indices = @transform_4, window_bounds = array<i64: 1, 32>}, {transform_indices = @transform_5, window_bounds = array<i64: 8, 32>}]} {
    %c0 = arith.constant 0 : index
    %c0_0 = arith.constant 0 : index
    %0 = vector.load %arg1[%c0, %c0_0] : memref<8x32xf32, #tpu.memory_space<vmem>>, vector<8x32xf32>
    %c0_1 = arith.constant 0 : index
    %c0_2 = arith.constant 0 : index
    %1 = vector.load %arg2[%c0_1, %c0_2] : memref<32x256xf32, #tpu.memory_space<vmem>>, vector<32x256xf32>
    %cst = arith.constant dense<0.000000e+00> : vector<8x256xf32>
    %2 = tpu.matmul %0, %1, %cst {dimension_numbers = #tpu.dot_dimension_numbers<[1], [0], [0], [1], [0, 0, 1, 1], [], []>} : vector<8x32xf32>, vector<32x256xf32>, vector<8x256xf32> -> vector<8x256xf32>
    %c0_3 = arith.constant 0 : index
    %c0_4 = arith.constant 0 : index
    %3 = vector.load %arg3[%c0_3, %c0_4] : memref<1x256xf32, #tpu.memory_space<vmem>>, vector<1x256xf32>
    %4 = vector.broadcast %3 : vector<1x256xf32> to vector<8x256xf32>
    %5 = arith.addf %2, %4 : vector<8x256xf32>
    %cst_5 = arith.constant 0.000000e+00 : f32
    %6 = vector.broadcast %cst_5 : f32 to vector<8x256xf32>
    %7 = arith.cmpf ogt, %5, %6 : vector<8x256xf32>
    %cst_6 = arith.constant 0.00999999977 : f32
    %8 = vector.broadcast %cst_6 : f32 to vector<8x256xf32>
    %9 = arith.mulf %8, %5 : vector<8x256xf32>
    %10 = arith.select %7, %5, %9 : vector<8x256xi1>, vector<8x256xf32>
    %c0_7 = arith.constant 0 : index
    %c0_8 = arith.constant 0 : index
    %11 = vector.load %arg4[%c0_7, %c0_8] : memref<256x32xf32, #tpu.memory_space<vmem>>, vector<256x32xf32>
    %cst_9 = arith.constant dense<0.000000e+00> : vector<8x32xf32>
    %12 = tpu.matmul %10, %11, %cst_9 {dimension_numbers = #tpu.dot_dimension_numbers<[1], [0], [0], [1], [0, 0, 1, 1], [], []>} : vector<8x256xf32>, vector<256x32xf32>, vector<8x32xf32> -> vector<8x32xf32>
    %c0_10 = arith.constant 0 : index
    %c0_11 = arith.constant 0 : index
    %13 = vector.load %arg5[%c0_10, %c0_11] : memref<1x32xf32, #tpu.memory_space<vmem>>, vector<1x32xf32>
    %14 = vector.broadcast %13 : vector<1x32xf32> to vector<8x32xf32>
    %15 = arith.addf %12, %14 : vector<8x32xf32>
    %cst_12 = arith.constant 0.000000e+00 : f32
    %16 = vector.broadcast %cst_12 : f32 to vector<8x32xf32>
    %17 = arith.cmpf ogt, %15, %16 : vector<8x32xf32>
    %cst_13 = arith.constant 0.00999999977 : f32
    %18 = vector.broadcast %cst_13 : f32 to vector<8x32xf32>
    %19 = arith.mulf %18, %15 : vector<8x32xf32>
    %20 = arith.select %17, %15, %19 : vector<8x32xi1>, vector<8x32xf32>
    %c0_14 = arith.constant 0 : index
    %c0_15 = arith.constant 0 : index
    %21 = vector.load %arg6[%c0_14, %c0_15] : memref<8x32xf32, #tpu.memory_space<vmem>>, vector<8x32xf32>
    tpu.vector_store %arg6[%c0_14, %c0_15], %20 {strides = array<i32>} : memref<8x32xf32, #tpu.memory_space<vmem>>, vector<8x32xf32>,
    return
  }
  func.func @transform_0(%arg0: i32) -> (i32, i32) {
    %c0_i32 = arith.constant 0 : i32
    %c0_i32_0 = arith.constant 0 : i32
    return %arg0, %c0_i32 : i32, i32
  }
  func.func @transform_1(%arg0: i32) -> (i32, i32) {
    %c0_i32 = arith.constant 0 : i32
    %c0_i32_0 = arith.constant 0 : i32
    %c0_i32_1 = arith.constant 0 : i32
    return %c0_i32, %c0_i32_0 : i32, i32
  }
  func.func @transform_2(%arg0: i32) -> (i32, i32) {
    %c0_i32 = arith.constant 0 : i32
    %c0_i32_0 = arith.constant 0 : i32
    %c0_i32_1 = arith.constant 0 : i32
    return %c0_i32, %c0_i32_0 : i32, i32
  }
  func.func @transform_3(%arg0: i32) -> (i32, i32) {
    %c0_i32 = arith.constant 0 : i32
    %c0_i32_0 = arith.constant 0 : i32
    %c0_i32_1 = arith.constant 0 : i32
    return %c0_i32, %c0_i32_0 : i32, i32
  }
  func.func @transform_4(%arg0: i32) -> (i32, i32) {
    %c0_i32 = arith.constant 0 : i32
    %c0_i32_0 = arith.constant 0 : i32
    %c0_i32_1 = arith.constant 0 : i32
    return %c0_i32, %c0_i32_0 : i32, i32
  }
  func.func @transform_5(%arg0: i32) -> (i32, i32) {
    %c0_i32 = arith.constant 0 : i32
    %c0_i32_0 = arith.constant 0 : i32
    return %arg0, %c0_i32 : i32, i32
  }
}

</mosaic_0001>

<llo_original>
// kernel: tpu_custom_call.1
$region0: #{tpu_custom_call.1}
  #allocation0 [shape = 'u32[]', space=smem, size = 0x4, offset = 0x4, fixed_abs, tag = 'smem constant byte address 0x4 - core index']
  #allocation1 [shape = 'u32[144,128]{1,0:T(1,128)}', space=vmem, size = 0x12000, scoped, tag = 'internal scratch']
  %s0 = inlined_call_operand.hbm [shape: f32[8,32], index: 0, kind: input, shape index: {}]
  %s1 = inlined_call_operand.hbm [shape: f32[32,256], index: 1, kind: input, shape index: {}]
  %s2 = inlined_call_operand.hbm [shape: f32[1,256], index: 2, kind: input, shape index: {}]
  %s3 = inlined_call_operand.hbm [shape: f32[256,32], index: 3, kind: input, shape index: {}]
  %s4 = inlined_call_operand.hbm [shape: f32[1,32], index: 4, kind: input, shape index: {}]
  %s5 = inlined_call_operand.hbm [shape: f32[8,32], index: 5, kind: output, shape index: {}]
  %s6 = sld [smem:[#allocation0]]
  $region50: #{tpu_custom_call.1} parent=0
    _
  %s8 = ssub.s32 1, %s6
  %s9 = scalar_select 0, %s8, %s6
  $region1: #{tpu_custom_call.1} parent=0
    #allocation2 [shape = 'u8[4096]{0}', space=vmem, size = 0x1000, scoped, tag = 'input window, operand 0, single buffered']
    #allocation3 [shape = 's32[1]{0}', space=sflag, size = 0x4, scoped, tag = 'scoped memory for tpu_custom_call.1']
    #allocation4 [shape = 's32[1]{0}', space=sflag, size = 0x4, scoped, tag = 'scoped memory for tpu_custom_call.1']
    #allocation5 [shape = 'u8[32768]{0}', space=vmem, size = 0x8000, scoped, tag = 'input window, operand 1, single buffered']
    #allocation6 [shape = 's32[1]{0}', space=sflag, size = 0x4, scoped, tag = 'scoped memory for tpu_custom_call.1']
    #allocation7 [shape = 'u8[1024]{0}', space=vmem, size = 0x400, scoped, tag = 'input window, operand 2, single buffered']
    #allocation8 [shape = 'u8[131072]{0}', space=vmem, size = 0x20000, scoped, tag = 'input window, operand 3, single buffered']
    #allocation9 [shape = 's32[1]{0}', space=sflag, size = 0x4, scoped, tag = 'scoped memory for tpu_custom_call.1']
    #allocation10 [shape = 'u8[512]{0}', space=vmem, size = 0x400, scoped, tag = 'input window, operand 4, single buffered']
    #allocation11 [shape = 'u8[4096]{0}', space=vmem, size = 0x1000, scoped, tag = 'output window, operand 0, single buffered']
    %10 = vsyncpa [#allocation3], 0
    %11 = vsyncpa [#allocation6], 0
    %12 = vsyncpa [#allocation9], 0
    %13 = vsyncpa [#allocation4], 0
    // Predicated region
    $region2: #{tpu_custom_call.1} parent=1 // pred_check
      _
    $region3: #{tpu_custom_call.1} parent=1 // pred_check_branch
      %15 = sbr.rel (0) target = $region5
    $region4: #{tpu_custom_call.1} parent=1 // pred_region
      %s17 = ssub.s32 128, 128
      %18 = vsyncadd [#allocation3], %s17
      %s20 = sshll.u32 [#allocation2], 4
      %s21 = int_to_ptr.vmem [resolvable:$true] %s20
      %23 = dma.hbm_to_vmem [thread:$0]  %s0, 128, %s21, [#allocation3]
    $region5: #{tpu_custom_call.1} parent=1 // pred_fallthru
      _
    // Predicated region
    $region6: #{tpu_custom_call.1} parent=1 // pred_check
      _
    $region7: #{tpu_custom_call.1} parent=1 // pred_check_branch
      %25 = sbr.rel (0) target = $region9
    $region8: #{tpu_custom_call.1} parent=1 // pred_region
      %s27 = ssub.s32 1024, 1024
      %28 = vsyncadd [#allocation6], %s27
      %s29 = sshll.u32 [#allocation5], 4
      %s30 = int_to_ptr.vmem [resolvable:$true] %s29
      %35 = dma.hbm_to_vmem [thread:$0]  %s1, 1024, %s30, [#allocation6], 256, 256, 16
    $region9: #{tpu_custom_call.1} parent=1 // pred_fallthru
      _
    // Predicated region
    $region10: #{tpu_custom_call.1} parent=1 // pred_check
      _
    $region11: #{tpu_custom_call.1} parent=1 // pred_check_branch
      %37 = sbr.rel (0) target = $region13
    $region12: #{tpu_custom_call.1} parent=1 // pred_region
      %s39 = ssub.s32 32, 32
      %40 = vsyncadd [#allocation6], %s39
      %s42 = sshll.u32 [#allocation7], 4
      %s43 = int_to_ptr.vmem [resolvable:$true] %s42
      %45 = dma.hbm_to_vmem [thread:$0]  %s2, 32, %s43, [#allocation6]
    $region13: #{tpu_custom_call.1} parent=1 // pred_fallthru
      _
    // Predicated region
    $region14: #{tpu_custom_call.1} parent=1 // pred_check
      _
    $region15: #{tpu_custom_call.1} parent=1 // pred_check_branch
      %47 = sbr.rel (0) target = $region17
    $region16: #{tpu_custom_call.1} parent=1 // pred_region
      %s49 = ssub.s32 4096, 4096
      %50 = vsyncadd [#allocation9], %s49
      %s51 = sshll.u32 [#allocation8], 4
      %s52 = int_to_ptr.vmem [resolvable:$true] %s51
      %57 = dma.hbm_to_vmem [thread:$0]  %s3, 4096, %s52, [#allocation9], 128, 128, 8
    $region17: #{tpu_custom_call.1} parent=1 // pred_fallthru
      _
    // Predicated region
    $region18: #{tpu_custom_call.1} parent=1 // pred_check
      _
    $region19: #{tpu_custom_call.1} parent=1 // pred_check_branch
      %59 = sbr.rel (0) target = $region21
    $region20: #{tpu_custom_call.1} parent=1 // pred_region
      %s61 = ssub.s32 16, 16
      %62 = vsyncadd [#allocation9], %s61
      %s64 = sshll.u32 [#allocation10], 4
      %s65 = int_to_ptr.vmem [resolvable:$true] %s64
      %67 = dma.hbm_to_vmem [thread:$0]  %s4, 16, %s65, [#allocation9]
    $region21: #{tpu_custom_call.1} parent=1 // pred_fallthru
      _
    // Predicated region
    $region22: #{tpu_custom_call.1} parent=1 // pred_check
      _
    $region23: #{tpu_custom_call.1} parent=1 // pred_check_branch
      %69 = sbr.rel (0) target = $region25
    $region24: #{tpu_custom_call.1} parent=1 // pred_region
      %70 = dma.done [#allocation3], 128
    $region25: #{tpu_custom_call.1} parent=1 // pred_fallthru
      _
    // Predicated region
    $region26: #{tpu_custom_call.1} parent=1 // pred_check
      _
    $region27: #{tpu_custom_call.1} parent=1 // pred_check_branch
      %72 = sbr.rel (0) target = $region29
    $region28: #{tpu_custom_call.1} parent=1 // pred_region
      %73 = dma.done [#allocation6], 1024
    $region29: #{tpu_custom_call.1} parent=1 // pred_fallthru
      _
    // Predicated region
    $region30: #{tpu_custom_call.1} parent=1 // pred_check
      _
    $region31: #{tpu_custom_call.1} parent=1 // pred_check_branch
      %75 = sbr.rel (0) target = $region33
    $region32: #{tpu_custom_call.1} parent=1 // pred_region
      %76 = dma.done [#allocation6], 32
    $region33: #{tpu_custom_call.1} parent=1 // pred_fallthru
      _
    // Predicated region
    $region34: #{tpu_custom_call.1} parent=1 // pred_check
      _
    $region35: #{tpu_custom_call.1} parent=1 // pred_check_branch
      %78 = sbr.rel (0) target = $region37
    $region36: #{tpu_custom_call.1} parent=1 // pred_region
      %79 = dma.done [#allocation9], 4096
    $region37: #{tpu_custom_call.1} parent=1 // pred_fallthru
      _
    // Predicated region
    $region38: #{tpu_custom_call.1} parent=1 // pred_check
      _
    $region39: #{tpu_custom_call.1} parent=1 // pred_check_branch
      %81 = sbr.rel (0) target = $region41
    $region40: #{tpu_custom_call.1} parent=1 // pred_region
      %82 = dma.done [#allocation9], 16
    $region41: #{tpu_custom_call.1} parent=1 // pred_fallthru
      _
    %v83 = vld [vmem:[#allocation2] sm:$0xff]
    %v84 = vld [vmem:[#allocation5] sm:$0xff]
    %v85 = vld [vmem:[#allocation5 + $0x8] sm:$0xff]
    %v86 = vld [vmem:[#allocation5 + $0x10] sm:$0xff]
    %v87 = vld [vmem:[#allocation5 + $0x18] sm:$0xff]
    %v88 = vld [vmem:[#allocation5 + $0x20] sm:$0xff]
    %v89 = vld [vmem:[#allocation5 + $0x28] sm:$0xff]
    %v90 = vld [vmem:[#allocation5 + $0x30] sm:$0xff]
    %v91 = vld [vmem:[#allocation5 + $0x38] sm:$0xff]
    %v92 = vld [vmem:[#allocation7] sm:$0x3]
    %v94 = vlaneseq
    %v95 = vshrl.u32 %v94, 7
    %v96 = vsub.s32 0, %v95
    %v97 = vrot.slane %v92, %v96
    %v98 = vlaneseq
    %v99 = vshrl.u32 %v98, 7
    %v100 = vsub.s32 1, %v99
    %v101 = vrot.slane %v92, %v100
    %vm104 = vcmask 261120
    %v106 = vsel %vm104, %v83, 0
    %108 = vmatprep.subr.mxu0 %v85
    %109 = vmatpush1.msra.mxu0 %v84
    %110 = vmatprep.subr.mxu0 %v87
    %111 = vmatpush1.msra.mxu0 %v86
    %112 = vmatprep.subr.mxu0 %v89
    %113 = vmatpush1.msra.mxu0 %v88
    %114 = vmatprep.subr.mxu0 %v91
    %115 = vmatpush1.msra.mxu0 %v90
    %116 = vmatprep.subr.mxu0 0.0
    %117 = vmatpush1.msra.mxu0 0.0
    %118 = vmatprep.subr.mxu0 0.0
    %119 = vmatpush1.msra.mxu0 0.0
    %120 = vmatprep.subr.mxu0 0.0
    %121 = vmatpush1.msra.mxu0 0.0
    %122 = vmatprep.subr.mxu0 0.0
    %123 = vmatpush1.msra.mxu0 0.0
    %124 = vmatprep.subr.mxu0 0.0
    %125 = vmatpush1.msra.mxu0 0.0
    %126 = vmatprep.subr.mxu0 0.0
    %127 = vmatpush1.msra.mxu0 0.0
    %128 = vmatprep.subr.mxu0 0.0
    %129 = vmatpush1.msra.mxu0 0.0
    %130 = vmatprep.subr.mxu0 0.0
    %131 = vmatpush1.msra.mxu0 0.0
    %132 = vmatprep.subr.mxu0 0.0
    %133 = vmatpush1.msra.mxu0 0.0
    %134 = vmatprep.subr.mxu0 0.0
    %135 = vmatpush1.msra.mxu0 0.0
    %136 = vmatprep.subr.mxu0 0.0
    %137 = vmatpush1.msra.mxu0 0.0
    %138 = vmatprep.subr.mxu0 0.0
    %139 = vmatpush1.msra.mxu0 0.0
    %140 = vmatprep.subr.mxu0 0.0
    %141 = vmatpush1.msra.mxu0 0.0
    %142 = vmatprep.subr.mxu0 0.0
    %143 = vmatpush1.msra.mxu0 0.0
    %144 = vmatprep.subr.mxu0 0.0
    %145 = vmatpush1.msra.mxu0 0.0
    %146 = vmatprep.subr.mxu0 0.0
    %147 = vmatpush1.msra.mxu0 0.0
    %148 = vmatprep.subr.mxu0 0.0
    %149 = vmatpush1.msra.mxu0 0.0
    %150 = vmatprep.subr.mxu0 0.0
    %151 = vmatpush1.msra.mxu0 0.0
    %152 = vmatprep.subr.mxu0 0.0
    %153 = vmatpush1.msra.mxu0 0.0
    %154 = vmatprep.subr.mxu0 0.0
    %155 = vmatpush1.msra.mxu0 0.0
    %156 = vmatprep.subr.mxu0 0.0
    %157 = vmatpush1.msra.mxu0 0.0
    %158 = vmatprep.subr.mxu0 0.0
    %159 = vmatpush1.msra.mxu0 0.0
    %160 = vmatprep.subr.mxu0 0.0
    %161 = vmatpush1.msra.mxu0 0.0
    %162 = vmatprep.subr.mxu0 0.0
    %163 = vmatpush1.msra.mxu0 0.0
    %164 = vmatprep.subr.mxu0 0.0
    %165 = vmatpush1.msra.mxu0 0.0
    %166 = vmatprep.subr.mxu0 0.0
    %167 = vmatpush1.msra.mxu0 0.0
    %168 = vmatprep.subr.mxu0 0.0
    %169 = vmatpush1.msra.mxu0 0.0
    %170 = vmatprep.subr.mxu0 0.0
    %171 = vmatpush1.msra.mxu0 0.0
    %172 = vmatprep.mubr.f32.mxu0 0.0
    %173 = vmatmul.mubr.f32.gmra.mrb[0].mxu0 %v106
    %v174 = vpop.f32.mrb[0].mxu0
    %v175 = vadd.f32 %v97, %v174
    %v176 = vpop.f32.mrb[0].mxu0
    %v177 = vadd.f32 %v101, %v176
    %178 = vdwg.mxu0
    %vm179 = vcmp.gt.f32.partialorder %v175, 0.0
    %vm180 = vcmp.gt.f32.partialorder %v177, 0.0
    %v181 = vmul.f32 %v175, 0.01
    %v182 = vmul.f32 %v177, 0.01
    %v183 = vsel %vm179, %v175, %v181
    %v184 = vsel %vm180, %v177, %v182
    %v185 = vld [vmem:[#allocation8] sm:$0xff]
    %v186 = vld [vmem:[#allocation8 + $0x8] sm:$0xff]
    %v187 = vld [vmem:[#allocation8 + $0x10] sm:$0xff]
    %v188 = vld [vmem:[#allocation8 + $0x18] sm:$0xff]
    %v189 = vld [vmem:[#allocation8 + $0x20] sm:$0xff]
    %v190 = vld [vmem:[#allocation8 + $0x28] sm:$0xff]
    %v191 = vld [vmem:[#allocation8 + $0x30] sm:$0xff]
    %v192 = vld [vmem:[#allocation8 + $0x38] sm:$0xff]
    %v193 = vld [vmem:[#allocation8 + $0x40] sm:$0xff]
    %v194 = vld [vmem:[#allocation8 + $0x48] sm:$0xff]
    %v195 = vld [vmem:[#allocation8 + $0x50] sm:$0xff]
    %v196 = vld [vmem:[#allocation8 + $0x58] sm:$0xff]
    %v197 = vld [vmem:[#allocation8 + $0x60] sm:$0xff]
    %v198 = vld [vmem:[#allocation8 + $0x68] sm:$0xff]
    %v199 = vld [vmem:[#allocation8 + $0x70] sm:$0xff]
    %v200 = vld [vmem:[#allocation8 + $0x78] sm:$0xff]
    %v201 = vld [vmem:[#allocation8 + $0x80] sm:$0xff]
    %v202 = vld [vmem:[#allocation8 + $0x88] sm:$0xff]
    %v203 = vld [vmem:[#allocation8 + $0x90] sm:$0xff]
    %v204 = vld [vmem:[#allocation8 + $0x98] sm:$0xff]
    %v205 = vld [vmem:[#allocation8 + $0xa0] sm:$0xff]
    %v206 = vld [vmem:[#allocation8 + $0xa8] sm:$0xff]
    %v207 = vld [vmem:[#allocation8 + $0xb0] sm:$0xff]
    %v208 = vld [vmem:[#allocation8 + $0xb8] sm:$0xff]
    %v209 = vld [vmem:[#allocation8 + $0xc0] sm:$0xff]
    %v210 = vld [vmem:[#allocation8 + $0xc8] sm:$0xff]
    %v211 = vld [vmem:[#allocation8 + $0xd0] sm:$0xff]
    %v212 = vld [vmem:[#allocation8 + $0xd8] sm:$0xff]
    %v213 = vld [vmem:[#allocation8 + $0xe0] sm:$0xff]
    %v214 = vld [vmem:[#allocation8 + $0xe8] sm:$0xff]
    %v215 = vld [vmem:[#allocation8 + $0xf0] sm:$0xff]
    %v216 = vld [vmem:[#allocation8 + $0xf8] sm:$0xff]
    %v217 = vld [vmem:[#allocation10] sm:$0x1]
    %v219 = vlaneseq
    %v220 = vshrl.u32 %v219, 7
    %v221 = vsub.s32 0, %v220
    %v222 = vrot.slane %v217, %v221
    %224 = vmatprep.subr.mxu0 0.0
    %225 = vmatpush1.msra.mxu0 %v185
    %226 = vmatprep.subr.mxu0 0.0
    %227 = vmatpush1.msra.mxu0 %v186
    %228 = vmatprep.subr.mxu0 0.0
    %229 = vmatpush1.msra.mxu0 %v187
    %230 = vmatprep.subr.mxu0 0.0
    %231 = vmatpush1.msra.mxu0 %v188
    %232 = vmatprep.subr.mxu0 0.0
    %233 = vmatpush1.msra.mxu0 %v189
    %234 = vmatprep.subr.mxu0 0.0
    %235 = vmatpush1.msra.mxu0 %v190
    %236 = vmatprep.subr.mxu0 0.0
    %237 = vmatpush1.msra.mxu0 %v191
    %238 = vmatprep.subr.mxu0 0.0
    %239 = vmatpush1.msra.mxu0 %v192
    %240 = vmatprep.subr.mxu0 0.0
    %241 = vmatpush1.msra.mxu0 %v193
    %242 = vmatprep.subr.mxu0 0.0
    %243 = vmatpush1.msra.mxu0 %v194
    %244 = vmatprep.subr.mxu0 0.0
    %245 = vmatpush1.msra.mxu0 %v195
    %246 = vmatprep.subr.mxu0 0.0
    %247 = vmatpush1.msra.mxu0 %v196
    %248 = vmatprep.subr.mxu0 0.0
    %249 = vmatpush1.msra.mxu0 %v197
    %250 = vmatprep.subr.mxu0 0.0
    %251 = vmatpush1.msra.mxu0 %v198
    %252 = vmatprep.subr.mxu0 0.0
    %253 = vmatpush1.msra.mxu0 %v199
    %254 = vmatprep.subr.mxu0 0.0
    %255 = vmatpush1.msra.mxu0 %v200
    %256 = vmatprep.subr.mxu0 0.0
    %257 = vmatpush1.msra.mxu0 %v201
    %258 = vmatprep.subr.mxu0 0.0
    %259 = vmatpush1.msra.mxu0 %v202
    %260 = vmatprep.subr.mxu0 0.0
    %261 = vmatpush1.msra.mxu0 %v203
    %262 = vmatprep.subr.mxu0 0.0
    %263 = vmatpush1.msra.mxu0 %v204
    %264 = vmatprep.subr.mxu0 0.0
    %265 = vmatpush1.msra.mxu0 %v205
    %266 = vmatprep.subr.mxu0 0.0
    %267 = vmatpush1.msra.mxu0 %v206
    %268 = vmatprep.subr.mxu0 0.0
    %269 = vmatpush1.msra.mxu0 %v207
    %270 = vmatprep.subr.mxu0 0.0
    %271 = vmatpush1.msra.mxu0 %v208
    %272 = vmatprep.subr.mxu0 0.0
    %273 = vmatpush1.msra.mxu0 %v209
    %274 = vmatprep.subr.mxu0 0.0
    %275 = vmatpush1.msra.mxu0 %v210
    %276 = vmatprep.subr.mxu0 0.0
    %277 = vmatpush1.msra.mxu0 %v211
    %278 = vmatprep.subr.mxu0 0.0
    %279 = vmatpush1.msra.mxu0 %v212
    %280 = vmatprep.subr.mxu0 0.0
    %281 = vmatpush1.msra.mxu0 %v213
    %282 = vmatprep.subr.mxu0 0.0
    %283 = vmatpush1.msra.mxu0 %v214
    %284 = vmatprep.subr.mxu0 0.0
    %285 = vmatpush1.msra.mxu0 %v215
    %286 = vmatprep.subr.mxu0 0.0
    %287 = vmatpush1.msra.mxu0 %v216
    %288 = vmatprep.mubr.f32.mxu0 %v184
    %289 = vmatmul.mubr.f32.gmra.mrb[0].mxu0 %v183
    %v290 = vpop.f32.mrb[0].mxu0
    %v291 = vadd.f32 %v222, %v290
    %v292 = vpop.f32.mrb[0].mxu0
    %293 = vdwg.mxu0
    %vm294 = vcmp.gt.f32.partialorder %v291, 0.0
    %v295 = vmul.f32 %v291, 0.01
    %v296 = vsel %vm294, %v291, %v295
    %297 = vst.msk [vmem:[#allocation11] sm:$0xff] %vm104, %v296
    // Predicated region
    $region42: #{tpu_custom_call.1} parent=1 // pred_check
      _
    $region43: #{tpu_custom_call.1} parent=1 // pred_check_branch
      %299 = sbr.rel (0) target = $region45
    $region44: #{tpu_custom_call.1} parent=1 // pred_region
      %s301 = ssub.s32 128, 128
      %302 = vsyncadd [#allocation4], %s301
      %s304 = sshll.u32 [#allocation11], 4
      %s305 = int_to_ptr.vmem [resolvable:$true] %s304
      %307 = dma.vmem_to_hbm [thread:$0]  %s305, 128, %s5, [#allocation4]
    $region45: #{tpu_custom_call.1} parent=1 // pred_fallthru
      _
    // Predicated region
    $region46: #{tpu_custom_call.1} parent=1 // pred_check
      _
    $region47: #{tpu_custom_call.1} parent=1 // pred_check_branch
      %309 = sbr.rel (0) target = $region49
    $region48: #{tpu_custom_call.1} parent=1 // pred_region
      %310 = dma.done [#allocation4], 128
    $region49: #{tpu_custom_call.1} parent=1 // pred_fallthru
      _
    %311 = vsyncpa [#allocation3], 1
    %312 = vsyncpa [#allocation6], 1
    %313 = vsyncpa [#allocation9], 1
    %314 = vsyncpa [#allocation4], 1

</llo_original>
